<compile_context>
chip_gen: v6e
topology: v6e:2x2x1
jax: 0.10.0
libtpu: 0.0.40
codegen_flags: <defaults>
</compile_context>

<pallas_src>
import jax
import jax.numpy as jnp
from jax.experimental import pallas as pl
from jax.experimental.pallas import tpu as pltpu


# --------------------------------------------------------------------------
# Parameter / buffer setup (mirrors __init__ + get_rotation + prepare)
# --------------------------------------------------------------------------
def make_omegas(dim: int, base, merge_hw: bool = True):
    assert merge_hw and dim % 4 == 0
    d = dim >> 1  # module halves dim when merge_hw=True
    # i == 0: exp = -arange(1, d, 2)/d, then einops.repeat '...->(r ...)' r=2 (tile)
    exp0 = -jnp.arange(1, d, 2, dtype=jnp.float32) / d
    exp0 = jnp.concatenate([exp0, exp0])              # length d
    w0 = jnp.power(jnp.float32(base[0]), exp0)
    # i == 1, 2: exp = -arange(0, d, 2)/d
    exp_hw = -jnp.arange(0, d, 2, dtype=jnp.float32) / d
    w1 = jnp.power(jnp.float32(base[1]), exp_hw)      # length d//2
    w2 = jnp.power(jnp.float32(base[2]), exp_hw)      # length d//2
    return w0, w1, w2


def get_rotation(dim, spatial_shape, rescale_shape, base, merge_hw=True):
    """Returns cos_theta, sin_theta of shape (L, dim//2), L = T*H*W."""
    w0, w1, w2 = make_omegas(dim, base, merge_hw)
    T, H, W = spatial_shape
    # fall_back_tuple: use rescale entry if set, else the spatial size
    rs = tuple(r if r else s for r, s in zip(rescale_shape, spatial_shape))
    t0 = jnp.outer(jnp.arange(T, dtype=jnp.float32) * rs[0] / T, w0)  # (T, d)
    t1 = jnp.outer(jnp.arange(H, dtype=jnp.float32) * rs[1] / H, w1)  # (H, d//2)
    t2 = jnp.outer(jnp.arange(W, dtype=jnp.float32) * rs[2] / W, w2)  # (W, d//2)
    d = dim >> 1
    # broadcast_cat(theta1[:,None], theta2[None,:]) -> (H, W, d)
    theta_hw = jnp.concatenate(
        [jnp.broadcast_to(t1[:, None, :], (H, W, d >> 1)),
         jnp.broadcast_to(t2[None, :, :], (H, W, d >> 1))], axis=-1)
    theta = t0[:, None, None, :] + theta_hw[None]                    # (T,H,W,d)
    theta = theta.reshape(T * H * W, d)
    return jnp.cos(theta), jnp.sin(theta)


def make_tables(cos_half, sin_half, num_heads, dtype):
    """Full-width, head-tiled tables with rotate_half sign folded into sin.

    cos_full[l, h*D + 2i]   = cos_full[l, h*D + 2i+1] =  cos_half[l, i]
    sin_signed[l, h*D + 2i] = -sin_half[l, i]
    sin_signed[l, h*D+2i+1] = +sin_half[l, i]
    """
    L, Dh = cos_half.shape
    D = 2 * Dh
    cos_full = jnp.repeat(cos_half, 2, axis=-1)                          # (L, D)
    sin_signed = jnp.stack([-sin_half, sin_half], axis=-1).reshape(L, D)  # (L, D)
    cos_t = jnp.tile(cos_full, (1, num_heads)).astype(dtype)             # (L, NH*D)
    sin_t = jnp.tile(sin_signed, (1, num_heads)).astype(dtype)           # (L, NH*D)
    return cos_t, sin_t


# --------------------------------------------------------------------------
# Pallas kernel: RoPE on the native interleaved layout, heads folded into lanes
# --------------------------------------------------------------------------
def rope_kernel(x_ref, cos_ref, sin_ref, o_ref):
    x = x_ref[0].astype(jnp.float32)          # (tl, NH*D)
    c = cos_ref[...].astype(jnp.float32)      # (tl, NH*D)
    s = sin_ref[...].astype(jnp.float32)      # (tl, NH*D), rotate_half sign folded in
    n = x.shape[-1]
    lane = jax.lax.broadcasted_iota(jnp.int32, x.shape, 1)
    is_even = (lane & 1) == 0
    # pair swap: even lane j takes x[j+1]  (roll by n-1 == roll by -1),
    #            odd  lane j takes x[j-1]  (roll by +1).
    # Pairs never cross a head boundary, so rolling the flat NH*D row is exact.
    x_swap = jnp.where(is_even,
                       pltpu.roll(x, n - 1, 1),
                       pltpu.roll(x, 1, 1))
    o_ref[0] = (x * c + x_swap * s).astype(o_ref.dtype)


def _pick_tile_rows(L, per_row_vmem_bytes, budget_bytes=8 << 20):
    """Largest tl (multiple of 8, dividing L) whose double-buffered working set
    fits the budget; fall back to full L if nothing smaller divides evenly."""
    cap = max(8, budget_bytes // max(per_row_vmem_bytes, 1))
    if L <= cap:
        return L
    start = (int(cap) // 8) * 8
    for cand in range(start, 7, -8):
        if L % cand == 0:
            return cand
    return L


def spatial_rope_forward(x, cos_half, sin_half, *, tl=None):
    """x: (B, L, NH, D); cos_half/sin_half: (L, D//2) from get_rotation."""
    B, L, NH, D = x.shape
    Dh = D // 2
    assert cos_half.shape == (L, Dh) and sin_half.shape == (L, Dh)
    NHD = NH * D

    # bf16 tables for bf16 activations halve table traffic; compute stays f32.
    table_dtype = jnp.bfloat16 if x.dtype == jnp.bfloat16 else jnp.float32
    cos_t, sin_t = make_tables(cos_half, sin_half, NH, table_dtype)   # (L, NHD)

    # Native layout, heads folded into the lane dim: free trailing-dim reshape.
    x3 = x.reshape(B, L, NHD)

    if tl is None:
        per_row = 2 * NHD * (2 * jnp.dtype(x.dtype).itemsize        # x + out, dbl-buf
                             + 2 * jnp.dtype(table_dtype).itemsize)  # cos + sin
        tl = _pick_tile_rows(L, per_row)
    assert L % tl == 0 and (tl % 8 == 0 or tl == L), (L, tl)

    x_spec = pl.BlockSpec((1, tl, NHD), lambda l, b: (b, l, 0))
    # Table tiles: index_map independent of b -> block stays resident across batch.
    cs_spec = pl.BlockSpec((tl, NHD), lambda l, b: (l, 0))

    out = pl.pallas_call(
        rope_kernel,
        out_shape=jax.ShapeDtypeStruct((B, L, NHD), x.dtype),
        grid_spec=pltpu.PrefetchScalarGridSpec(
            num_scalar_prefetch=0,
            grid=(L // tl, B),   # b innermost: cos/sin re-used across the batch axis
            in_specs=[x_spec, cs_spec, cs_spec],
            out_specs=x_spec,
        ),
        compiler_params=pltpu.CompilerParams(
            dimension_semantics=("parallel", "parallel"),
            vmem_limit_bytes=32 << 20),
    )(x3, cos_t, sin_t)

    return out.reshape(B, L, NH, D)

# TODO(synk): the visible_idx (masked-token gather -> cos_theta_visible) branch
# of forward() is not implemented; only the full-sequence path is covered.


# --------------------------------------------------------------------------
# Pure-JAX reference (direct transcription of the PyTorch forward)
# --------------------------------------------------------------------------
def reference_forward(x, cos_half, sin_half):
    cos_f = jnp.repeat(cos_half, 2, axis=-1)[:, None, :]   # (L, 1, D)
    sin_f = jnp.repeat(sin_half, 2, axis=-1)[:, None, :]
    x1 = x[..., 0::2]
    x2 = x[..., 1::2]
    rot = jnp.stack([-x2, x1], axis=-1).reshape(x.shape)   # rotate_half
    return x * cos_f + rot * sin_f


if __name__ == "__main__":
    key = jax.random.PRNGKey(0)

    dim = 128                            # head dim, divisible by 4 (merge_hw=True)
    base = (10000.0, 2333.0, 10007.0)
    rescale_shape = (None, None, None)   # falls back to spatial_shape
    B, NH = 2, 2

    # config 1: tiny, single l-block (default tl)
    # config 2: more tokens with forced tl=32 to exercise the multi-step grid
    #           and the batch-resident cos/sin path
    for spatial_shape, tl in (((2, 4, 4), None), ((2, 8, 8), 32)):
        T, H, W = spatial_shape
        L = T * H * W
        cos_half, sin_half = get_rotation(dim, spatial_shape, rescale_shape, base)

        key, sub = jax.random.split(key)
        x = jax.random.normal(sub, (B, L, NH, dim), dtype=jnp.float32)

        out = spatial_rope_forward(x, cos_half, sin_half, tl=tl)
        out = jax.block_until_ready(out)

        ref = reference_forward(x, cos_half, sin_half)
        assert out.shape == x.shape and out.dtype == x.dtype
        assert bool(jnp.allclose(out, ref, atol=1e-5, rtol=1e-5)), \
            f"mismatch vs reference for spatial_shape={spatial_shape}"

    print("KERNEL_OK")
</pallas_src>

<mosaic_0001>
module attributes {stable_mosaic.version = 11 : i64} {
  func.func @rope_kernel(%arg0: i32, %arg1: i32, %arg2: memref<1x32x256xf32, #tpu.memory_space<vmem>>, %arg3: memref<32x256xf32, #tpu.memory_space<vmem>>, %arg4: memref<32x256xf32, #tpu.memory_space<vmem>>, %arg5: memref<1x32x256xf32, #tpu.memory_space<vmem>>) attributes {dimension_semantics = [#tpu.dimension_semantics<parallel>, #tpu.dimension_semantics<parallel>], iteration_bounds = array<i64: 1, 2>, scalar_prefetch = 0 : i64, scratch_operands = 0 : i64, tpu.core_type = #tpu.core_type<tc>, window_params = [{transform_indices = @transform_0, window_bounds = array<i64: 1, 32, 256>}, {transform_indices = @transform_1, window_bounds = array<i64: 32, 256>}, {transform_indices = @transform_2, window_bounds = array<i64: 32, 256>}, {transform_indices = @transform_3, window_bounds = array<i64: 1, 32, 256>}]} {
    %c0 = arith.constant 0 : index
    %c0_0 = arith.constant 0 : index
    %c0_1 = arith.constant 0 : index
    %0 = vector.load %arg2[%c0, %c0_0, %c0_1] : memref<1x32x256xf32, #tpu.memory_space<vmem>>, vector<1x32x256xf32>
    %1 = vector.shape_cast %0 : vector<1x32x256xf32> to vector<32x256xf32>
    %c0_2 = arith.constant 0 : index
    %c0_3 = arith.constant 0 : index
    %2 = vector.load %arg3[%c0_2, %c0_3] : memref<32x256xf32, #tpu.memory_space<vmem>>, vector<32x256xf32>
    %c0_4 = arith.constant 0 : index
    %c0_5 = arith.constant 0 : index
    %3 = vector.load %arg4[%c0_4, %c0_5] : memref<32x256xf32, #tpu.memory_space<vmem>>, vector<32x256xf32>
    %4 = tpu.iota {dimensions = array<i32: 1>} : vector<32x256xi32>
    %c1_i32 = arith.constant 1 : i32
    %5 = vector.broadcast %c1_i32 : i32 to vector<32x256xi32>
    %6 = arith.andi %4, %5 : vector<32x256xi32>
    %c0_i32 = arith.constant 0 : i32
    %7 = vector.broadcast %c0_i32 : i32 to vector<32x256xi32>
    %8 = arith.cmpi eq, %6, %7 : vector<32x256xi32>
    %c255_i32 = arith.constant 255 : i32
    %9 = tpu.dynamic_rotate %1 by %c255_i32 dim 1 : vector<32x256xf32>, i32 -> vector<32x256xf32>
    %c1_i32_6 = arith.constant 1 : i32
    %10 = tpu.dynamic_rotate %1 by %c1_i32_6 dim 1 : vector<32x256xf32>, i32 -> vector<32x256xf32>
    %11 = arith.select %8, %9, %10 : vector<32x256xi1>, vector<32x256xf32>
    %12 = arith.mulf %1, %2 : vector<32x256xf32>
    %13 = arith.mulf %11, %3 : vector<32x256xf32>
    %14 = arith.addf %12, %13 : vector<32x256xf32>
    %c0_7 = arith.constant 0 : index
    %c0_8 = arith.constant 0 : index
    %c0_9 = arith.constant 0 : index
    %15 = vector.load %arg5[%c0_7, %c0_8, %c0_9] : memref<1x32x256xf32, #tpu.memory_space<vmem>>, vector<1x32x256xf32>
    %16 = vector.shape_cast %15 : vector<1x32x256xf32> to vector<32x256xf32>
    %17 = vector.shape_cast %14 : vector<32x256xf32> to vector<1x32x256xf32>
    tpu.vector_store %arg5[%c0_7, %c0_8, %c0_9], %17 {strides = array<i32>} : memref<1x32x256xf32, #tpu.memory_space<vmem>>, vector<1x32x256xf32>,
    return
  }
  func.func @transform_0(%arg0: i32, %arg1: i32) -> (i32, i32, i32) {
    %c0_i32 = arith.constant 0 : i32
    %c0_i32_0 = arith.constant 0 : i32
    return %arg1, %arg0, %c0_i32 : i32, i32, i32
  }
  func.func @transform_1(%arg0: i32, %arg1: i32) -> (i32, i32) {
    %c0_i32 = arith.constant 0 : i32
    %c0_i32_0 = arith.constant 0 : i32
    return %arg0, %c0_i32 : i32, i32
  }
  func.func @transform_2(%arg0: i32, %arg1: i32) -> (i32, i32) {
    %c0_i32 = arith.constant 0 : i32
    %c0_i32_0 = arith.constant 0 : i32
    return %arg0, %c0_i32 : i32, i32
  }
  func.func @transform_3(%arg0: i32, %arg1: i32) -> (i32, i32, i32) {
    %c0_i32 = arith.constant 0 : i32
    %c0_i32_0 = arith.constant 0 : i32
    return %arg1, %arg0, %c0_i32 : i32, i32, i32
  }
}

</mosaic_0001>

<llo_original>
// kernel: tpu_custom_call.1
$region0: #{tpu_custom_call.1}
  #allocation0 [shape = 'u32[]', space=smem, size = 0x4, offset = 0x4, fixed_abs, tag = 'smem constant byte address 0x4 - core index']
  #allocation1 [shape = 'u32[144,128]{1,0:T(1,128)}', space=vmem, size = 0x12000, scoped, tag = 'internal scratch']
  %s0 = inlined_call_operand.hbm [shape: f32[2,32,256], index: 0, kind: input, shape index: {}]
  %s1 = inlined_call_operand.hbm [shape: f32[32,256], index: 1, kind: input, shape index: {}]
  %s2 = inlined_call_operand.hbm [shape: f32[32,256], index: 2, kind: input, shape index: {}]
  %s3 = inlined_call_operand.hbm [shape: f32[2,32,256], index: 3, kind: output, shape index: {}]
  %s4 = sld [smem:[#allocation0]]
  $region57: #{tpu_custom_call.1} parent=0
    _
  %s6 = ssub.s32 1, %s4
  %s7 = scalar_select 0, %s6, %s4
  $region1: #{tpu_custom_call.1} parent=0
    #allocation2 [shape = 'u8[65536]{0}', space=vmem, size = 0x10000, scoped, tag = 'input window, operand 0']
    #allocation3 [shape = 's32[2]{0}', space=sflag, size = 0x8, scoped, tag = 'scoped memory for tpu_custom_call.1']
    #allocation4 [shape = 's32[2]{0}', space=sflag, size = 0x8, scoped, tag = 'scoped memory for tpu_custom_call.1']
    #allocation5 [shape = 'u8[32768]{0}', space=vmem, size = 0x8000, scoped, tag = 'input window, operand 1, single buffered']
    #allocation6 [shape = 's32[1]{0}', space=sflag, size = 0x4, scoped, tag = 'scoped memory for tpu_custom_call.1']
    #allocation7 [shape = 'u8[32768]{0}', space=vmem, size = 0x8000, scoped, tag = 'input window, operand 2, single buffered']
    #allocation8 [shape = 'u8[65536]{0}', space=vmem, size = 0x10000, scoped, tag = 'output window, operand 0']
    %8 = vsyncpa [#allocation3], 0
    %s9 = scalar_lea.sflag [#allocation3], 1
    %10 = vsyncpa %s9, 0
    %11 = vsyncpa [#allocation6], 0
    %12 = vsyncpa [#allocation4], 0
    %s13 = scalar_lea.sflag [#allocation4], 1
    %14 = vsyncpa %s13, 0
    loop: start=0, step=1, limit=4
    $region2: #{tpu_custom_call.1} parent=1 // loop_pre_header
      _
    $region3: #{tpu_custom_call.1} parent=1 // loop_header
      %s16 = sphi 0, %s20
      %p17 = scmp.ge.s32.totalorder %s16, 4
      %s23 = sphi 0, %s35
      %s24 = sphi 0, %s31
      %s25 = sphi 0, %s23
      %s26 = sphi 0, %s24
      %s27 = sphi 0, %s25
      %s28 = sphi 0, %s26
      %s40 = sphi 0, %s42
      %s43 = sphi 0, %s40
      %s44 = sphi 0, %s43
      %s60 = sphi 0, %s44
      %s66 = sphi 0, %s68
      %s69 = sphi 0, %s66
      %s70 = sphi 0, %s69
      %s86 = sphi 0, %s70
      %s92 = sphi 0, %s94
      %s95 = sphi 0, %s92
      %s96 = sphi 0, %s95
      %s112 = sphi 0, %s96
      %s120 = sphi 0, %s122
      %s123 = sphi 0, %s120
      %s124 = sphi 0, %s123
      %s140 = sphi 0, %s124
    $region4: #{tpu_custom_call.1} parent=1 // loop_header_branch
      %19 = sbr.rel (%p17) target = $region8
    $region5: #{tpu_custom_call.1} parent=1 // loop_body
      %s21 = ssub.s32 %s16, 1
      %s22 = ssub.s32 %s16, 2
      %s29 = sadd.s32 1, %s24
      %p30 = scmp.ge.s32.totalorder %s29, 2
      %s31 = scalar_select %p30, 0, %s29
      %s32 = sadd.s32 1, %s23
      %s33 = scalar_select %p30, %s32, %s23
      %p34 = scmp.ge.s32.totalorder %s33, 1
      %s35 = scalar_select %p34, 0, %s33
      %s36 = ssub.s32 %s24, %s31
      %s37 = ssub.s32 %s23, %s35
      %s38 = sor.u32 %s36, %s37
      %p39 = scmp.eq.s32.totalorder %s38, 0
      %s41 = sadd.s32 %s40, 1
      %s42 = scalar_select %p39, %s40, %s41
      %p45 = pneg %p39
      %p46 = scmp.eq.s32.totalorder %s16, 1
      %p47 = por %p45, %p46
      %p48 = scmp.ne.s32.totalorder %s40, %s43
      %p49 = scmp.eq.s32.totalorder %s16, 0
      %p50 = por %p48, %p49
      %p51 = scmp.ne.s32.totalorder %s40, %s43
      %p52 = scmp.eq.s32.totalorder %s21, 1
      %p53 = por %p51, %p52
      %p54 = scmp.ne.s32.totalorder %s43, %s44
      %p55 = scmp.eq.s32.totalorder %s21, 0
      %p56 = por %p54, %p55
      %p57 = scmp.ne.s32.totalorder %s43, %s44
      %p58 = scmp.eq.s32.totalorder %s22, 1
      %p59 = por %p57, %p58
      %p61 = scmp.ne.s32.totalorder %s44, %s60
      %p62 = scmp.eq.s32.totalorder %s22, 0
      %p63 = por %p61, %p62
      %s64 = ssub.s32 %s23, %s35
      %p65 = scmp.eq.s32.totalorder %s64, 0
      %s67 = sadd.s32 %s66, 1
      %s68 = scalar_select %p65, %s66, %s67
      %p71 = pneg %p65
      %p72 = scmp.eq.s32.totalorder %s16, 1
      %p73 = por %p71, %p72
      %p74 = scmp.ne.s32.totalorder %s66, %s69
      %p75 = scmp.eq.s32.totalorder %s16, 0
      %p76 = por %p74, %p75
      %p77 = scmp.ne.s32.totalorder %s66, %s69
      %p78 = scmp.eq.s32.totalorder %s21, 1
      %p79 = por %p77, %p78
      %p80 = scmp.ne.s32.totalorder %s69, %s70
      %p81 = scmp.eq.s32.totalorder %s21, 0
      %p82 = por %p80, %p81
      %p83 = scmp.ne.s32.totalorder %s69, %s70
      %p84 = scmp.eq.s32.totalorder %s22, 1
      %p85 = por %p83, %p84
      %p87 = scmp.ne.s32.totalorder %s70, %s86
      %p88 = scmp.eq.s32.totalorder %s22, 0
      %p89 = por %p87, %p88
      %s90 = ssub.s32 %s23, %s35
      %p91 = scmp.eq.s32.totalorder %s90, 0
      %s93 = sadd.s32 %s92, 1
      %s94 = scalar_select %p91, %s92, %s93
      %p97 = pneg %p91
      %p98 = scmp.eq.s32.totalorder %s16, 1
      %p99 = por %p97, %p98
      %p100 = scmp.ne.s32.totalorder %s92, %s95
      %p101 = scmp.eq.s32.totalorder %s16, 0
      %p102 = por %p100, %p101
      %p103 = scmp.ne.s32.totalorder %s92, %s95
      %p104 = scmp.eq.s32.totalorder %s21, 1
      %p105 = por %p103, %p104
      %p106 = scmp.ne.s32.totalorder %s95, %s96
      %p107 = scmp.eq.s32.totalorder %s21, 0
      %p108 = por %p106, %p107
      %p109 = scmp.ne.s32.totalorder %s95, %s96
      %p110 = scmp.eq.s32.totalorder %s22, 1
      %p111 = por %p109, %p110
      %p113 = scmp.ne.s32.totalorder %s96, %s112
      %p114 = scmp.eq.s32.totalorder %s22, 0
      %p115 = por %p113, %p114
      %s116 = ssub.s32 %s24, %s31
      %s117 = ssub.s32 %s23, %s35
      %s118 = sor.u32 %s116, %s117
      %p119 = scmp.eq.s32.totalorder %s118, 0
      %s121 = sadd.s32 %s120, 1
      %s122 = scalar_select %p119, %s120, %s121
      %p125 = pneg %p119
      %p126 = scmp.eq.s32.totalorder %s16, 1
      %p127 = por %p125, %p126
      %p128 = scmp.ne.s32.totalorder %s120, %s123
      %p129 = scmp.eq.s32.totalorder %s16, 0
      %p130 = por %p128, %p129
      %p131 = scmp.ne.s32.totalorder %s120, %s123
      %p132 = scmp.eq.s32.totalorder %s21, 1
      %p133 = por %p131, %p132
      %p134 = scmp.ne.s32.totalorder %s123, %s124
      %p135 = scmp.eq.s32.totalorder %s21, 0
      %p136 = por %p134, %p135
      %p137 = scmp.ne.s32.totalorder %s123, %s124
      %p138 = scmp.eq.s32.totalorder %s22, 1
      %p139 = por %p137, %p138
      %p141 = scmp.ne.s32.totalorder %s124, %s140
      %p142 = scmp.eq.s32.totalorder %s22, 0
      %p143 = por %p141, %p142
      %p144 = scmp.le.s32.totalorder 1, %s16
      %p145 = scmp.lt.s32.totalorder %s16, 3
      %p146 = pnand %p144, %p145
      %p147 = pneg %p146
      // Predicated region
      $region9: #{tpu_custom_call.1} parent=5 // pred_check
        _
      $region10: #{tpu_custom_call.1} parent=5 // pred_check_branch
        %149 = sbr.rel (%p146) target = $region12
      $region11: #{tpu_custom_call.1} parent=5 // pred_region
        %s150 = ssub.s32 %s16, 1
        // Predicated region
        $region13: #{tpu_custom_call.1} parent=11 // pred_check
          %p151 = pneg %p82
        $region14: #{tpu_custom_call.1} parent=11 // pred_check_branch
          %153 = sbr.rel (%p151) target = $region16
        $region15: #{tpu_custom_call.1} parent=11 // pred_region
          %s154 = smul.u32 4, %s25
          %s156 = ssub.s32 1024, 1024
          %157 = vsyncadd [#allocation6], %s156
          %s158 = smul.addr %s154, 2
          %s159 = smul.addr %s158, 128
          %s160 = scalar_lea.hbm %s1, %s159
          %s161 = sshll.u32 [#allocation5], 4
          %s162 = int_to_ptr.vmem [resolvable:$true] %s161
          %167 = dma.hbm_to_vmem [thread:$0]  %s160, 1024, %s162, [#allocation6], 256, 256, 16
        $region16: #{tpu_custom_call.1} parent=11 // pred_fallthru
          _
        // Predicated region
        $region17: #{tpu_custom_call.1} parent=11 // pred_check
          %p168 = pneg %p108
        $region18: #{tpu_custom_call.1} parent=11 // pred_check_branch
          %170 = sbr.rel (%p168) target = $region20
        $region19: #{tpu_custom_call.1} parent=11 // pred_region
          %s171 = smul.u32 4, %s25
          %s173 = ssub.s32 1024, 1024
          %174 = vsyncadd [#allocation6], %s173
          %s175 = smul.addr %s171, 2
          %s176 = smul.addr %s175, 128
          %s177 = scalar_lea.hbm %s2, %s176
          %s178 = sshll.u32 [#allocation7], 4
          %s179 = int_to_ptr.vmem [resolvable:$true] %s178
          %184 = dma.hbm_to_vmem [thread:$0]  %s177, 1024, %s179, [#allocation6], 256, 256, 16
        $region20: #{tpu_custom_call.1} parent=11 // pred_fallthru
          _
      $region12: #{tpu_custom_call.1} parent=5 // pred_fallthru
        _
      %p185 = scmp.lt.s32.totalorder %s16, 2
      // Predicated region
      $region21: #{tpu_custom_call.1} parent=5 // pred_check
        %p186 = pneg %p185
      $region22: #{tpu_custom_call.1} parent=5 // pred_check_branch
        %188 = sbr.rel (%p186) target = $region24
      $region23: #{tpu_custom_call.1} parent=5 // pred_region
        // Predicated region
        $region25: #{tpu_custom_call.1} parent=23 // pred_check
          %p189 = pneg %p50
        $region26: #{tpu_custom_call.1} parent=23 // pred_check_branch
          %191 = sbr.rel (%p189) target = $region28
        $region27: #{tpu_custom_call.1} parent=23 // pred_region
          %s192 = sand.u32 %s40, 1
          %s193 = scalar_lea.sflag [#allocation3], %s192
          %s194 = sand.u32 %s40, 1
          %s195 = smul.addr %s194, 64
          %s196 = scalar_lea.vmem [#allocation2], %s195
          %s197 = smul.u32 4, %s23
          %s199 = ssub.s32 1024, 1024
          %200 = vsyncadd %s193, %s199
          %s201 = smul.addr %s197, 2
          %s202 = smul.addr %s24, 8
          %s203 = sadd.s32 %s201, %s202
          %s204 = smul.addr %s203, 128
          %s205 = scalar_lea.hbm %s0, %s204
          %s206 = sshll.u32 %s196, 4
          %s207 = int_to_ptr.vmem [resolvable:$true] %s206
          %212 = dma.hbm_to_vmem [thread:$0]  %s205, 1024, %s207, %s193, 256, 256, 16
        $region28: #{tpu_custom_call.1} parent=23 // pred_fallthru
          _
      $region24: #{tpu_custom_call.1} parent=5 // pred_fallthru
        _
      %p213 = scmp.le.s32.totalorder 1, %s16
      %p214 = scmp.lt.s32.totalorder %s16, 3
      %p215 = pnand %p213, %p214
      %p216 = pneg %p215
      // Predicated region
      $region29: #{tpu_custom_call.1} parent=5 // pred_check
        _
      $region30: #{tpu_custom_call.1} parent=5 // pred_check_branch
        %218 = sbr.rel (%p215) target = $region32
      $region31: #{tpu_custom_call.1} parent=5 // pred_region
        %s219 = ssub.s32 %s16, 1
        %s220 = sand.u32 %s43, 1
        %s221 = scalar_lea.sflag [#allocation3], %s220
        %s222 = sand.u32 %s43, 1
        %s223 = smul.addr %s222, 64
        %s224 = scalar_lea.vmem [#allocation2], %s223
        // Predicated region
        $region33: #{tpu_custom_call.1} parent=31 // pred_check
          %p225 = pneg %p56
        $region34: #{tpu_custom_call.1} parent=31 // pred_check_branch
          %227 = sbr.rel (%p225) target = $region36
        $region35: #{tpu_custom_call.1} parent=31 // pred_region
          %228 = dma.done %s221, 1024
        $region36: #{tpu_custom_call.1} parent=31 // pred_fallthru
          _
        // Predicated region
        $region37: #{tpu_custom_call.1} parent=31 // pred_check
          %p229 = pneg %p82
        $region38: #{tpu_custom_call.1} parent=31 // pred_check_branch
          %231 = sbr.rel (%p229) target = $region40
        $region39: #{tpu_custom_call.1} parent=31 // pred_region
          %232 = dma.done [#allocation6], 1024
        $region40: #{tpu_custom_call.1} parent=31 // pred_fallthru
          _
        // Predicated region
        $region41: #{tpu_custom_call.1} parent=31 // pred_check
          %p233 = pneg %p108
        $region42: #{tpu_custom_call.1} parent=31 // pred_check_branch
          %235 = sbr.rel (%p233) target = $region44
        $region43: #{tpu_custom_call.1} parent=31 // pred_region
          %236 = dma.done [#allocation6], 1024
        $region44: #{tpu_custom_call.1} parent=31 // pred_fallthru
          _
        %s237 = sand.u32 %s43, 1
        %s238 = scalar_lea.sflag [#allocation3], %s237
        %s239 = sand.u32 %s43, 1
        %s240 = smul.addr %s239, 64
        %s241 = scalar_lea.vmem [#allocation2], %s240
        %p242 = pneg %p56
        %p243 = pneg %p53
        %p244 = pneg %p82
        %p245 = pneg %p79
        %p246 = pneg %p108
        %p247 = pneg %p105
        %p248 = pneg %p136
        %p249 = pneg %p133
        %s250 = sand.u32 %s123, 1
        %s251 = scalar_lea.sflag [#allocation4], %s250
        %s252 = sand.u32 %s123, 1
        %s253 = smul.addr %s252, 64
        %s254 = scalar_lea.vmem [#allocation8], %s253
        %s255 = smul.u32 4, %s25
        %s256 = smul.u32 4, %s25
        %s257 = smul.u32 4, %s25
        %s258 = smul.u32 4, %s25
        %v259 = vld [vmem:[%s224] sm:$0xff]
        %v260 = vld [vmem:[%s224 + $0x8] sm:$0xff]
        %v261 = vld [vmem:[%s224 + $0x10] sm:$0xff]
        %v262 = vld [vmem:[%s224 + $0x18] sm:$0xff]
        %v263 = vld [vmem:[%s224 + $0x20] sm:$0xff]
        %v264 = vld [vmem:[%s224 + $0x28] sm:$0xff]
        %v265 = vld [vmem:[%s224 + $0x30] sm:$0xff]
        %v266 = vld [vmem:[%s224 + $0x38] sm:$0xff]
        %v267 = vld [vmem:[#allocation5] sm:$0xff]
        %v268 = vld [vmem:[#allocation5 + $0x8] sm:$0xff]
        %v269 = vld [vmem:[#allocation5 + $0x10] sm:$0xff]
        %v270 = vld [vmem:[#allocation5 + $0x18] sm:$0xff]
        %v271 = vld [vmem:[#allocation5 + $0x20] sm:$0xff]
        %v272 = vld [vmem:[#allocation5 + $0x28] sm:$0xff]
        %v273 = vld [vmem:[#allocation5 + $0x30] sm:$0xff]
        %v274 = vld [vmem:[#allocation5 + $0x38] sm:$0xff]
        %v275 = vld [vmem:[#allocation7] sm:$0xff]
        %v276 = vld [vmem:[#allocation7 + $0x8] sm:$0xff]
        %v277 = vld [vmem:[#allocation7 + $0x10] sm:$0xff]
        %v278 = vld [vmem:[#allocation7 + $0x18] sm:$0xff]
        %v279 = vld [vmem:[#allocation7 + $0x20] sm:$0xff]
        %v280 = vld [vmem:[#allocation7 + $0x28] sm:$0xff]
        %v281 = vld [vmem:[#allocation7 + $0x30] sm:$0xff]
        %v282 = vld [vmem:[#allocation7 + $0x38] sm:$0xff]
        %v283 = vlaneseq
        %v284 = vand.u32 %v283, 127
        %v285 = vadd.s32 %v284, 128
        %v286 = vand.u32 %v284, 1
        %v287 = vand.u32 %v285, 1
        %vm288 = vcmp.eq.s32.totalorder %v286, 0
        %vm289 = vcmp.eq.s32.totalorder %v287, 0
        %290 = vrot.lane.b32.xlu0 %v259, 127
        %v291 = vpop.permute.xlu0 %290
        %292 = vrot.lane.b32.xlu0 %v261, 127
        %v293 = vpop.permute.xlu0 %292
        %294 = vrot.lane.b32.xlu0 %v263, 127
        %v295 = vpop.permute.xlu0 %294
        %296 = vrot.lane.b32.xlu0 %v265, 127
        %v297 = vpop.permute.xlu0 %296
        %298 = vrot.lane.b32.xlu0 %v260, 127
        %v299 = vpop.permute.xlu0 %298
        %300 = vrot.lane.b32.xlu0 %v262, 127
        %v301 = vpop.permute.xlu0 %300
        %302 = vrot.lane.b32.xlu0 %v264, 127
        %v303 = vpop.permute.xlu0 %302
        %304 = vrot.lane.b32.xlu0 %v266, 127
        %v305 = vpop.permute.xlu0 %304
        %vm306 = vcmp.lt.s32.totalorder %v284, 127
        %v307 = vsel %vm306, %v291, %v299
        %v308 = vsel %vm306, %v293, %v301
        %v309 = vsel %vm306, %v295, %v303
        %v310 = vsel %vm306, %v297, %v305
        %v311 = vsel %vm306, %v299, %v291
        %v312 = vsel %vm306, %v301, %v293
        %v313 = vsel %vm306, %v303, %v295
        %v314 = vsel %vm306, %v305, %v297
        %315 = vrot.lane.b32.xlu0 %v259, 1
        %v316 = vpop.permute.xlu0 %315
        %317 = vrot.lane.b32.xlu0 %v261, 1
        %v318 = vpop.permute.xlu0 %317
        %319 = vrot.lane.b32.xlu0 %v263, 1
        %v320 = vpop.permute.xlu0 %319
        %321 = vrot.lane.b32.xlu0 %v265, 1
        %v322 = vpop.permute.xlu0 %321
        %323 = vrot.lane.b32.xlu0 %v260, 1
        %v324 = vpop.permute.xlu0 %323
        %325 = vrot.lane.b32.xlu0 %v262, 1
        %v326 = vpop.permute.xlu0 %325
        %327 = vrot.lane.b32.xlu0 %v264, 1
        %v328 = vpop.permute.xlu0 %327
        %329 = vrot.lane.b32.xlu0 %v266, 1
        %v330 = vpop.permute.xlu0 %329
        %vm331 = vcmp.lt.s32.totalorder %v284, 1
        %v332 = vsel %vm331, %v316, %v324
        %v333 = vsel %vm331, %v318, %v326
        %v334 = vsel %vm331, %v320, %v328
        %v335 = vsel %vm331, %v322, %v330
        %v336 = vsel %vm331, %v324, %v316
        %v337 = vsel %vm331, %v326, %v318
        %v338 = vsel %vm331, %v328, %v320
        %v339 = vsel %vm331, %v330, %v322
        %v340 = vsel %vm288, %v307, %v336
        %v341 = vsel %vm289, %v311, %v332
        %v342 = vsel %vm288, %v308, %v337
        %v343 = vsel %vm289, %v312, %v333
        %v344 = vsel %vm288, %v309, %v338
        %v345 = vsel %vm289, %v313, %v334
        %v346 = vsel %vm288, %v310, %v339
        %v347 = vsel %vm289, %v314, %v335
        %v348 = vmul.f32 %v259, %v267
        %v349 = vmul.f32 %v260, %v268
        %v350 = vmul.f32 %v261, %v269
        %v351 = vmul.f32 %v262, %v270
        %v352 = vmul.f32 %v263, %v271
        %v353 = vmul.f32 %v264, %v272
        %v354 = vmul.f32 %v265, %v273
        %v355 = vmul.f32 %v266, %v274
        %v356 = vmul.f32 %v340, %v275
        %v357 = vmul.f32 %v341, %v276
        %v358 = vmul.f32 %v342, %v277
        %v359 = vmul.f32 %v343, %v278
        %v360 = vmul.f32 %v344, %v279
        %v361 = vmul.f32 %v345, %v280
        %v362 = vmul.f32 %v346, %v281
        %v363 = vmul.f32 %v347, %v282
        %v364 = vadd.f32 %v348, %v356
        %v365 = vadd.f32 %v349, %v357
        %v366 = vadd.f32 %v350, %v358
        %v367 = vadd.f32 %v351, %v359
        %v368 = vadd.f32 %v352, %v360
        %v369 = vadd.f32 %v353, %v361
        %v370 = vadd.f32 %v354, %v362
        %v371 = vadd.f32 %v355, %v363
        %372 = vst [vmem:[%s254] sm:$0xff] %v364
        %373 = vst [vmem:[%s254 + $0x8] sm:$0xff] %v365
        %374 = vst [vmem:[%s254 + $0x10] sm:$0xff] %v366
        %375 = vst [vmem:[%s254 + $0x18] sm:$0xff] %v367
        %376 = vst [vmem:[%s254 + $0x20] sm:$0xff] %v368
        %377 = vst [vmem:[%s254 + $0x28] sm:$0xff] %v369
        %378 = vst [vmem:[%s254 + $0x30] sm:$0xff] %v370
        %379 = vst [vmem:[%s254 + $0x38] sm:$0xff] %v371
        %s380 = sand.u32 %s123, 1
        %s381 = scalar_lea.sflag [#allocation4], %s380
        %s382 = sand.u32 %s123, 1
        %s383 = smul.addr %s382, 64
        %s384 = scalar_lea.vmem [#allocation8], %s383
        // Predicated region
        $region45: #{tpu_custom_call.1} parent=31 // pred_check
          %p385 = pneg %p133
        $region46: #{tpu_custom_call.1} parent=31 // pred_check_branch
          %387 = sbr.rel (%p385) target = $region48
        $region47: #{tpu_custom_call.1} parent=31 // pred_region
          %s388 = smul.u32 4, %s25
          %s390 = ssub.s32 1024, 1024
          %391 = vsyncadd %s381, %s390
          %s392 = smul.addr %s388, 2
          %s393 = smul.addr %s26, 8
          %s394 = sadd.s32 %s392, %s393
          %s395 = smul.addr %s394, 128
          %s396 = scalar_lea.hbm %s3, %s395
          %s397 = sshll.u32 %s384, 4
          %s398 = int_to_ptr.vmem [resolvable:$true] %s397
          %403 = dma.vmem_to_hbm [thread:$0]  %s398, 1024, %s396, %s381, 256, 256, 16
        $region48: #{tpu_custom_call.1} parent=31 // pred_fallthru
          _
      $region32: #{tpu_custom_call.1} parent=5 // pred_fallthru
        _
      %p404 = scmp.le.s32.totalorder 2, %s16
      // Predicated region
      $region49: #{tpu_custom_call.1} parent=5 // pred_check
        %p405 = pneg %p404
      $region50: #{tpu_custom_call.1} parent=5 // pred_check_branch
        %407 = sbr.rel (%p405) target = $region52
      $region51: #{tpu_custom_call.1} parent=5 // pred_region
        %s408 = ssub.s32 %s16, 2
        // Predicated region
        $region53: #{tpu_custom_call.1} parent=51 // pred_check
          %p409 = pneg %p139
        $region54: #{tpu_custom_call.1} parent=51 // pred_check_branch
          %411 = sbr.rel (%p409) target = $region56
        $region55: #{tpu_custom_call.1} parent=51 // pred_region
          %s412 = sand.u32 %s124, 1
          %s413 = scalar_lea.sflag [#allocation4], %s412
          %s414 = sand.u32 %s124, 1
          %s415 = smul.addr %s414, 64
          %s416 = scalar_lea.vmem [#allocation8], %s415
          %417 = dma.done %s413, 1024
        $region56: #{tpu_custom_call.1} parent=51 // pred_fallthru
          _
      $region52: #{tpu_custom_call.1} parent=5 // pred_fallthru
        _
    $region6: #{tpu_custom_call.1} parent=1 // loop_footer
      %s20 = sadd.s32 1, %s16
    $region7: #{tpu_custom_call.1} parent=1 // loop_footer_branch
      %15 = sbr.rel target = $region3
    $region8: #{tpu_custom_call.1} parent=1 // loop_exit
      _
    %418 = vsyncpa [#allocation3], 1
    %s419 = scalar_lea.sflag [#allocation3], 1
    %420 = vsyncpa %s419, 1
    %421 = vsyncpa [#allocation6], 1
    %422 = vsyncpa [#allocation4], 1
    %s423 = scalar_lea.sflag [#allocation4], 1
    %424 = vsyncpa %s423, 1

</llo_original>
